<compile_context>
chip_gen: v7x
topology: tpu7x:2x2x1
jax: 0.10.0
libtpu: 0.0.40
codegen_flags: <defaults>
</compile_context>

<pallas_src>
import functools

import jax
import jax.numpy as jnp
from jax.experimental import pallas as pl
from jax.experimental.pallas import tpu as pltpu


def _round_up(x, m):
    return ((x + m - 1) // m) * m


# ----------------------------------------------------------------------------
# Kernel: fused n-layer Linear+Sigmoid chain, applied to both siamese branches
# inside one grid step (weights loaded once per step).  Matmuls hit the MXU
# with f32 accumulation; sigmoid's exp lands on the EUP.
# ----------------------------------------------------------------------------
def _make_abnet_kernel(n_layers, use_bf16_matmul=False):
    def kernel(*refs):
        x_refs = refs[0:2]
        p_refs = refs[2:2 + 2 * n_layers]
        o_refs = refs[2 + 2 * n_layers:2 + 2 * n_layers + 2]
        for x_ref, o_ref in zip(x_refs, o_refs):
            h = x_ref[...]
            for l in range(n_layers):
                w = p_refs[2 * l][...]
                b = p_refs[2 * l + 1][...]
                if use_bf16_matmul:
                    z = jnp.dot(h.astype(jnp.bfloat16), w.astype(jnp.bfloat16),
                                preferred_element_type=jnp.float32)
                else:
                    z = jnp.dot(h, w, preferred_element_type=jnp.float32)
                h = jax.nn.sigmoid(z + b)        # nn.Sigmoid() after every Linear
            o_ref[...] = h.astype(o_ref.dtype)
    return kernel


def _choose_tile(B, max_tile_rows):
    """Balanced batch tiling; >=2 tiles for non-trivial B (v7x megacore)."""
    if B <= 64:
        return B, 1                      # full-dim block, exempt from (8,128) rule
    n_tiles = max(2, pl.cdiv(B, max_tile_rows))
    tile = _round_up(pl.cdiv(B, n_tiles), 8)
    n_tiles = pl.cdiv(B, tile)
    return tile, n_tiles


# ----------------------------------------------------------------------------
# Wrapper
# ----------------------------------------------------------------------------
def abnet_forward(x1, x2, params, *, max_tile_rows=2048, use_bf16_matmul=False):
    """Siamese forward: returns (output1, output2), both (B, dims[-1])."""
    n_layers = len(params)
    B, D0 = x1.shape
    assert x2.shape == (B, D0)
    D_out = params[-1][0].shape[1]

    assert max_tile_rows % 8 == 0
    tile_rows, n_tiles = _choose_tile(B, max_tile_rows)
    padded_B = tile_rows * n_tiles
    if padded_B != B:
        # Only hit for ragged large batches; < 8 dead rows per tile.
        pad = padded_B - B
        x1 = jnp.pad(x1, ((0, pad), (0, 0)))
        x2 = jnp.pad(x2, ((0, pad), (0, 0)))

    # Biases kept as (1, D) rows so they broadcast over the batch tile.
    flat_params = []
    for w, b in params:
        flat_params.append(w)
        flat_params.append(b.reshape(1, -1))

    x_spec = pl.BlockSpec((tile_rows, D0), lambda i: (i, 0))
    out_spec = pl.BlockSpec((tile_rows, D_out), lambda i: (i, 0))

    def full_spec(arr):
        return pl.BlockSpec(arr.shape, lambda i: (0,) * arr.ndim)

    # Honest scoped-VMEM budget (2x headroom), capped well under v7x's 64 MiB.
    itemsize = 4
    io_bytes = 2 * 2 * tile_rows * (D0 + D_out) * itemsize      # 2 branches, dbl-buf
    param_bytes = 2 * sum(int(a.size) for a in flat_params) * itemsize
    max_hidden = max(w.shape[1] for (w, _) in params)
    act_bytes = 4 * tile_rows * max_hidden * itemsize
    vmem_limit = int(min(max(2 * (io_bytes + param_bytes + act_bytes), 4 << 20),
                         32 << 20))

    kernel = _make_abnet_kernel(n_layers, use_bf16_matmul=use_bf16_matmul)

    f = pl.pallas_call(
        kernel,
        out_shape=(jax.ShapeDtypeStruct((padded_B, D_out), x1.dtype),
                   jax.ShapeDtypeStruct((padded_B, D_out), x2.dtype)),
        grid_spec=pltpu.PrefetchScalarGridSpec(
            num_scalar_prefetch=0,
            grid=(n_tiles,),
            in_specs=[x_spec, x_spec] + [full_spec(a) for a in flat_params],
            out_specs=[out_spec, out_spec],
        ),
        compiler_params=pltpu.CompilerParams(
            dimension_semantics=("parallel",),   # batch tiles shard across TCs (v7x)
            vmem_limit_bytes=vmem_limit),
    )
    o1, o2 = f(x1, x2, *flat_params)
    if padded_B != B:
        o1, o2 = o1[:B], o2[:B]
    return o1, o2


# ----------------------------------------------------------------------------
# Deterministic parameter init (PyTorch nn.Linear-style uniform(+-1/sqrt(fan_in)))
# ----------------------------------------------------------------------------
def init_params(key, dims):
    params = []
    for i in range(1, len(dims)):
        d_in, d_out = dims[i - 1], dims[i]
        key, kw, kb = jax.random.split(key, 3)
        bound = 1.0 / jnp.sqrt(d_in)
        w = jax.random.uniform(kw, (d_in, d_out), jnp.float32, -bound, bound)
        b = jax.random.uniform(kb, (d_out,), jnp.float32, -bound, bound)
        params.append((w, b))
    return params


def reference_forward(x1, x2, params):
    def branch(x):
        h = x
        for w, b in params:
            h = jax.nn.sigmoid(h @ w + b)
        return h
    return branch(x1), branch(x2)


# ----------------------------------------------------------------------------
if __name__ == "__main__":
    # dims per ABnet.__init__ (len(dims) >= 3): 32 -> 64 -> 48 -> 16
    dims = (32, 64, 48, 16)
    batch = 16

    key = jax.random.PRNGKey(0)
    key, k1, k2 = jax.random.split(key, 3)
    x1 = jax.random.normal(k1, (batch, dims[0]), jnp.float32)
    x2 = jax.random.normal(k2, (batch, dims[0]), jnp.float32)

    params = init_params(key, dims)

    o1, o2 = abnet_forward(x1, x2, params)
    jax.block_until_ready((o1, o2))

    r1, r2 = reference_forward(x1, x2, params)
    assert o1.shape == (batch, dims[-1]) and o2.shape == (batch, dims[-1])
    assert jnp.allclose(o1, r1, atol=1e-5, rtol=1e-5)
    assert jnp.allclose(o2, r2, atol=1e-5, rtol=1e-5)

    print("KERNEL_OK")
</pallas_src>

<mosaic_0001>
module attributes {stable_mosaic.version = 11 : i64} {
  func.func @kernel(%arg0: i32, %arg1: memref<16x32xf32, #tpu.memory_space<vmem>>, %arg2: memref<16x32xf32, #tpu.memory_space<vmem>>, %arg3: memref<32x64xf32, #tpu.memory_space<vmem>>, %arg4: memref<1x64xf32, #tpu.memory_space<vmem>>, %arg5: memref<64x48xf32, #tpu.memory_space<vmem>>, %arg6: memref<1x48xf32, #tpu.memory_space<vmem>>, %arg7: memref<48x16xf32, #tpu.memory_space<vmem>>, %arg8: memref<1x16xf32, #tpu.memory_space<vmem>>, %arg9: memref<16x16xf32, #tpu.memory_space<vmem>>, %arg10: memref<16x16xf32, #tpu.memory_space<vmem>>) attributes {dimension_semantics = [#tpu.dimension_semantics<parallel>], iteration_bounds = array<i64: 1>, scalar_prefetch = 0 : i64, scratch_operands = 0 : i64, tpu.core_type = #tpu.core_type<tc>, window_params = [{transform_indices = @transform_0, window_bounds = array<i64: 16, 32>}, {transform_indices = @transform_1, window_bounds = array<i64: 16, 32>}, {pipeline_mode = #tpu.pipeline_mode<synchronous>, transform_indices = @transform_2, window_bounds = array<i64: 32, 64>}, {pipeline_mode = #tpu.pipeline_mode<synchronous>, transform_indices = @transform_3, window_bounds = array<i64: 1, 64>}, {pipeline_mode = #tpu.pipeline_mode<synchronous>, transform_indices = @transform_4, window_bounds = array<i64: 64, 48>}, {pipeline_mode = #tpu.pipeline_mode<synchronous>, transform_indices = @transform_5, window_bounds = array<i64: 1, 48>}, {pipeline_mode = #tpu.pipeline_mode<synchronous>, transform_indices = @transform_6, window_bounds = array<i64: 48, 16>}, {pipeline_mode = #tpu.pipeline_mode<synchronous>, transform_indices = @transform_7, window_bounds = array<i64: 1, 16>}, {transform_indices = @transform_8, window_bounds = array<i64: 16, 16>}, {transform_indices = @transform_9, window_bounds = array<i64: 16, 16>}]} {
    %c0 = arith.constant 0 : index
    %c0_0 = arith.constant 0 : index
    %0 = vector.load %arg1[%c0, %c0_0] : memref<16x32xf32, #tpu.memory_space<vmem>>, vector<16x32xf32>
    %c0_1 = arith.constant 0 : index
    %c0_2 = arith.constant 0 : index
    %1 = vector.load %arg3[%c0_1, %c0_2] : memref<32x64xf32, #tpu.memory_space<vmem>>, vector<32x64xf32>
    %c0_3 = arith.constant 0 : index
    %c0_4 = arith.constant 0 : index
    %2 = vector.load %arg4[%c0_3, %c0_4] : memref<1x64xf32, #tpu.memory_space<vmem>>, vector<1x64xf32>
    %cst = arith.constant dense<0.000000e+00> : vector<16x64xf32>
    %3 = tpu.matmul %0, %1, %cst {dimension_numbers = #tpu.dot_dimension_numbers<[1], [0], [0], [1], [0, 0, 1, 1], [], []>} : vector<16x32xf32>, vector<32x64xf32>, vector<16x64xf32> -> vector<16x64xf32>
    %4 = vector.broadcast %2 : vector<1x64xf32> to vector<16x64xf32>
    %5 = arith.addf %3, %4 : vector<16x64xf32>
    %6 = arith.negf %5 : vector<16x64xf32>
    %7 = math.exp %6 : vector<16x64xf32>
    %cst_5 = arith.constant 1.000000e+00 : f32
    %8 = vector.broadcast %cst_5 : f32 to vector<16x64xf32>
    %9 = arith.addf %8, %7 : vector<16x64xf32>
    %10 = arith.divf %8, %9 : vector<16x64xf32>
    %c0_6 = arith.constant 0 : index
    %c0_7 = arith.constant 0 : index
    %11 = vector.load %arg5[%c0_6, %c0_7] : memref<64x48xf32, #tpu.memory_space<vmem>>, vector<64x48xf32>
    %c0_8 = arith.constant 0 : index
    %c0_9 = arith.constant 0 : index
    %12 = vector.load %arg6[%c0_8, %c0_9] : memref<1x48xf32, #tpu.memory_space<vmem>>, vector<1x48xf32>
    %cst_10 = arith.constant dense<0.000000e+00> : vector<16x48xf32>
    %13 = tpu.matmul %10, %11, %cst_10 {dimension_numbers = #tpu.dot_dimension_numbers<[1], [0], [0], [1], [0, 0, 1, 1], [], []>} : vector<16x64xf32>, vector<64x48xf32>, vector<16x48xf32> -> vector<16x48xf32>
    %14 = vector.broadcast %12 : vector<1x48xf32> to vector<16x48xf32>
    %15 = arith.addf %13, %14 : vector<16x48xf32>
    %16 = arith.negf %15 : vector<16x48xf32>
    %17 = math.exp %16 : vector<16x48xf32>
    %cst_11 = arith.constant 1.000000e+00 : f32
    %18 = vector.broadcast %cst_11 : f32 to vector<16x48xf32>
    %19 = arith.addf %18, %17 : vector<16x48xf32>
    %20 = arith.divf %18, %19 : vector<16x48xf32>
    %c0_12 = arith.constant 0 : index
    %c0_13 = arith.constant 0 : index
    %21 = vector.load %arg7[%c0_12, %c0_13] : memref<48x16xf32, #tpu.memory_space<vmem>>, vector<48x16xf32>
    %c0_14 = arith.constant 0 : index
    %c0_15 = arith.constant 0 : index
    %22 = vector.load %arg8[%c0_14, %c0_15] : memref<1x16xf32, #tpu.memory_space<vmem>>, vector<1x16xf32>
    %cst_16 = arith.constant dense<0.000000e+00> : vector<16x16xf32>
    %23 = tpu.matmul %20, %21, %cst_16 {dimension_numbers = #tpu.dot_dimension_numbers<[1], [0], [0], [1], [0, 0, 1, 1], [], []>} : vector<16x48xf32>, vector<48x16xf32>, vector<16x16xf32> -> vector<16x16xf32>
    %24 = vector.broadcast %22 : vector<1x16xf32> to vector<16x16xf32>
    %25 = arith.addf %23, %24 : vector<16x16xf32>
    %26 = arith.negf %25 : vector<16x16xf32>
    %27 = math.exp %26 : vector<16x16xf32>
    %cst_17 = arith.constant 1.000000e+00 : f32
    %28 = vector.broadcast %cst_17 : f32 to vector<16x16xf32>
    %29 = arith.addf %28, %27 : vector<16x16xf32>
    %30 = arith.divf %28, %29 : vector<16x16xf32>
    %c0_18 = arith.constant 0 : index
    %c0_19 = arith.constant 0 : index
    %31 = vector.load %arg9[%c0_18, %c0_19] : memref<16x16xf32, #tpu.memory_space<vmem>>, vector<16x16xf32>
    tpu.vector_store %arg9[%c0_18, %c0_19], %30 {strides = array<i32>} : memref<16x16xf32, #tpu.memory_space<vmem>>, vector<16x16xf32>,
    %c0_20 = arith.constant 0 : index
    %c0_21 = arith.constant 0 : index
    %32 = vector.load %arg2[%c0_20, %c0_21] : memref<16x32xf32, #tpu.memory_space<vmem>>, vector<16x32xf32>
    %c0_22 = arith.constant 0 : index
    %c0_23 = arith.constant 0 : index
    %33 = vector.load %arg3[%c0_22, %c0_23] : memref<32x64xf32, #tpu.memory_space<vmem>>, vector<32x64xf32>
    %c0_24 = arith.constant 0 : index
    %c0_25 = arith.constant 0 : index
    %34 = vector.load %arg4[%c0_24, %c0_25] : memref<1x64xf32, #tpu.memory_space<vmem>>, vector<1x64xf32>
    %cst_26 = arith.constant dense<0.000000e+00> : vector<16x64xf32>
    %35 = tpu.matmul %32, %33, %cst_26 {dimension_numbers = #tpu.dot_dimension_numbers<[1], [0], [0], [1], [0, 0, 1, 1], [], []>} : vector<16x32xf32>, vector<32x64xf32>, vector<16x64xf32> -> vector<16x64xf32>
    %36 = vector.broadcast %34 : vector<1x64xf32> to vector<16x64xf32>
    %37 = arith.addf %35, %36 : vector<16x64xf32>
    %38 = arith.negf %37 : vector<16x64xf32>
    %39 = math.exp %38 : vector<16x64xf32>
    %cst_27 = arith.constant 1.000000e+00 : f32
    %40 = vector.broadcast %cst_27 : f32 to vector<16x64xf32>
    %41 = arith.addf %40, %39 : vector<16x64xf32>
    %42 = arith.divf %40, %41 : vector<16x64xf32>
    %c0_28 = arith.constant 0 : index
    %c0_29 = arith.constant 0 : index
    %43 = vector.load %arg5[%c0_28, %c0_29] : memref<64x48xf32, #tpu.memory_space<vmem>>, vector<64x48xf32>
    %c0_30 = arith.constant 0 : index
    %c0_31 = arith.constant 0 : index
    %44 = vector.load %arg6[%c0_30, %c0_31] : memref<1x48xf32, #tpu.memory_space<vmem>>, vector<1x48xf32>
    %cst_32 = arith.constant dense<0.000000e+00> : vector<16x48xf32>
    %45 = tpu.matmul %42, %43, %cst_32 {dimension_numbers = #tpu.dot_dimension_numbers<[1], [0], [0], [1], [0, 0, 1, 1], [], []>} : vector<16x64xf32>, vector<64x48xf32>, vector<16x48xf32> -> vector<16x48xf32>
    %46 = vector.broadcast %44 : vector<1x48xf32> to vector<16x48xf32>
    %47 = arith.addf %45, %46 : vector<16x48xf32>
    %48 = arith.negf %47 : vector<16x48xf32>
    %49 = math.exp %48 : vector<16x48xf32>
    %cst_33 = arith.constant 1.000000e+00 : f32
    %50 = vector.broadcast %cst_33 : f32 to vector<16x48xf32>
    %51 = arith.addf %50, %49 : vector<16x48xf32>
    %52 = arith.divf %50, %51 : vector<16x48xf32>
    %c0_34 = arith.constant 0 : index
    %c0_35 = arith.constant 0 : index
    %53 = vector.load %arg7[%c0_34, %c0_35] : memref<48x16xf32, #tpu.memory_space<vmem>>, vector<48x16xf32>
    %c0_36 = arith.constant 0 : index
    %c0_37 = arith.constant 0 : index
    %54 = vector.load %arg8[%c0_36, %c0_37] : memref<1x16xf32, #tpu.memory_space<vmem>>, vector<1x16xf32>
    %cst_38 = arith.constant dense<0.000000e+00> : vector<16x16xf32>
    %55 = tpu.matmul %52, %53, %cst_38 {dimension_numbers = #tpu.dot_dimension_numbers<[1], [0], [0], [1], [0, 0, 1, 1], [], []>} : vector<16x48xf32>, vector<48x16xf32>, vector<16x16xf32> -> vector<16x16xf32>
    %56 = vector.broadcast %54 : vector<1x16xf32> to vector<16x16xf32>
    %57 = arith.addf %55, %56 : vector<16x16xf32>
    %58 = arith.negf %57 : vector<16x16xf32>
    %59 = math.exp %58 : vector<16x16xf32>
    %cst_39 = arith.constant 1.000000e+00 : f32
    %60 = vector.broadcast %cst_39 : f32 to vector<16x16xf32>
    %61 = arith.addf %60, %59 : vector<16x16xf32>
    %62 = arith.divf %60, %61 : vector<16x16xf32>
    %c0_40 = arith.constant 0 : index
    %c0_41 = arith.constant 0 : index
    %63 = vector.load %arg10[%c0_40, %c0_41] : memref<16x16xf32, #tpu.memory_space<vmem>>, vector<16x16xf32>
    tpu.vector_store %arg10[%c0_40, %c0_41], %62 {strides = array<i32>} : memref<16x16xf32, #tpu.memory_space<vmem>>, vector<16x16xf32>,
    return
  }
  func.func @transform_0(%arg0: i32) -> (i32, i32) {
    %c0_i32 = arith.constant 0 : i32
    %c0_i32_0 = arith.constant 0 : i32
    return %arg0, %c0_i32 : i32, i32
  }
  func.func @transform_1(%arg0: i32) -> (i32, i32) {
    %c0_i32 = arith.constant 0 : i32
    %c0_i32_0 = arith.constant 0 : i32
    return %arg0, %c0_i32 : i32, i32
  }
  func.func @transform_2(%arg0: i32) -> (i32, i32) {
    %c0_i32 = arith.constant 0 : i32
    %c0_i32_0 = arith.constant 0 : i32
    %c0_i32_1 = arith.constant 0 : i32
    return %c0_i32, %c0_i32_0 : i32, i32
  }
  func.func @transform_3(%arg0: i32) -> (i32, i32) {
    %c0_i32 = arith.constant 0 : i32
    %c0_i32_0 = arith.constant 0 : i32
    %c0_i32_1 = arith.constant 0 : i32
    return %c0_i32, %c0_i32_0 : i32, i32
  }
  func.func @transform_4(%arg0: i32) -> (i32, i32) {
    %c0_i32 = arith.constant 0 : i32
    %c0_i32_0 = arith.constant 0 : i32
    %c0_i32_1 = arith.constant 0 : i32
    return %c0_i32, %c0_i32_0 : i32, i32
  }
  func.func @transform_5(%arg0: i32) -> (i32, i32) {
    %c0_i32 = arith.constant 0 : i32
    %c0_i32_0 = arith.constant 0 : i32
    %c0_i32_1 = arith.constant 0 : i32
    return %c0_i32, %c0_i32_0 : i32, i32
  }
  func.func @transform_6(%arg0: i32) -> (i32, i32) {
    %c0_i32 = arith.constant 0 : i32
    %c0_i32_0 = arith.constant 0 : i32
    %c0_i32_1 = arith.constant 0 : i32
    return %c0_i32, %c0_i32_0 : i32, i32
  }
  func.func @transform_7(%arg0: i32) -> (i32, i32) {
    %c0_i32 = arith.constant 0 : i32
    %c0_i32_0 = arith.constant 0 : i32
    %c0_i32_1 = arith.constant 0 : i32
    return %c0_i32, %c0_i32_0 : i32, i32
  }
  func.func @transform_8(%arg0: i32) -> (i32, i32) {
    %c0_i32 = arith.constant 0 : i32
    %c0_i32_0 = arith.constant 0 : i32
    return %arg0, %c0_i32 : i32, i32
  }
  func.func @transform_9(%arg0: i32) -> (i32, i32) {
    %c0_i32 = arith.constant 0 : i32
    %c0_i32_0 = arith.constant 0 : i32
    return %arg0, %c0_i32 : i32, i32
  }
}

</mosaic_0001>

<llo_original>
// kernel: tpu_custom_call.1
$region0: #{tpu_custom_call.1}
  #allocation0 [shape = 'u32[]', space=smem, size = 0x4, offset = 0x4, fixed_abs, tag = 'smem constant byte address 0x4 - core index']
  #allocation1 [shape = 'u32[144,128]{1,0:T(1,128)}', space=vmem, size = 0x12000, scoped, tag = 'internal scratch']
  %s0 = inlined_call_operand.vmem [shape: f32[16,32], index: 0, kind: input, shape index: {}]
  %s1 = inlined_call_operand.vmem [shape: f32[16,32], index: 1, kind: input, shape index: {}]
  %s2 = inlined_call_operand.vmem [shape: f32[32,64], index: 2, kind: input, shape index: {}]
  %s3 = inlined_call_operand.vmem [shape: f32[1,64], index: 3, kind: input, shape index: {}]
  %s4 = inlined_call_operand.vmem [shape: f32[64,48], index: 4, kind: input, shape index: {}]
  %s5 = inlined_call_operand.vmem [shape: f32[1,48], index: 5, kind: input, shape index: {}]
  %s6 = inlined_call_operand.vmem [shape: f32[48,16], index: 6, kind: input, shape index: {}]
  %s7 = inlined_call_operand.vmem [shape: f32[1,16], index: 7, kind: input, shape index: {}]
  %s8 = inlined_call_operand.hbm [shape: f32[16,16], index: 8, kind: output, shape index: {0}]
  %s9 = inlined_call_operand.hbm [shape: f32[16,16], index: 9, kind: output, shape index: {1}]
  %10 = xla_tuple %s8, %s9
  %s11 = sld [smem:[#allocation0]]
  $region50: #{tpu_custom_call.1} parent=0
    _
  %s13 = ssub.s32 1, %s11
  %s14 = scalar_select 0, %s13, %s11
  $region1: #{tpu_custom_call.1} parent=0
    #allocation2 [shape = 'u8[8192]{0}', space=vmem, size = 0x2000, scoped, tag = 'output window, operand 0, single buffered']
    #allocation3 [shape = 's32[1]{0}', space=sflag, size = 0x4, scoped, tag = 'scoped memory for tpu_custom_call.1']
    #allocation4 [shape = 'u8[8192]{0}', space=vmem, size = 0x2000, scoped, tag = 'output window, operand 1, single buffered']
    #allocation5 [shape = 's32[1]{0}', space=sflag, size = 0x4, scoped, tag = 'scoped memory for tpu_custom_call.1']
    %15 = vsyncpa [#allocation3], 0
    %16 = vsyncpa [#allocation5], 0
    // Predicated region
    $region2: #{tpu_custom_call.1} parent=1 // pred_check
      _
    $region3: #{tpu_custom_call.1} parent=1 // pred_check_branch
      %18 = sbr.rel (0) target = $region5
    $region4: #{tpu_custom_call.1} parent=1 // pred_region
      _
    $region5: #{tpu_custom_call.1} parent=1 // pred_fallthru
      _
    // Predicated region
    $region6: #{tpu_custom_call.1} parent=1 // pred_check
      _
    $region7: #{tpu_custom_call.1} parent=1 // pred_check_branch
      %20 = sbr.rel (0) target = $region9
    $region8: #{tpu_custom_call.1} parent=1 // pred_region
      _
    $region9: #{tpu_custom_call.1} parent=1 // pred_fallthru
      _
    // Predicated region
    $region10: #{tpu_custom_call.1} parent=1 // pred_check
      _
    $region11: #{tpu_custom_call.1} parent=1 // pred_check_branch
      %22 = sbr.rel (0) target = $region13
    $region12: #{tpu_custom_call.1} parent=1 // pred_region
      _
    $region13: #{tpu_custom_call.1} parent=1 // pred_fallthru
      _
    // Predicated region
    $region14: #{tpu_custom_call.1} parent=1 // pred_check
      _
    $region15: #{tpu_custom_call.1} parent=1 // pred_check_branch
      %24 = sbr.rel (0) target = $region17
    $region16: #{tpu_custom_call.1} parent=1 // pred_region
      _
    $region17: #{tpu_custom_call.1} parent=1 // pred_fallthru
      _
    // Predicated region
    $region18: #{tpu_custom_call.1} parent=1 // pred_check
      _
    $region19: #{tpu_custom_call.1} parent=1 // pred_check_branch
      %26 = sbr.rel (0) target = $region21
    $region20: #{tpu_custom_call.1} parent=1 // pred_region
      _
    $region21: #{tpu_custom_call.1} parent=1 // pred_fallthru
      _
    // Predicated region
    $region22: #{tpu_custom_call.1} parent=1 // pred_check
      _
    $region23: #{tpu_custom_call.1} parent=1 // pred_check_branch
      %28 = sbr.rel (0) target = $region25
    $region24: #{tpu_custom_call.1} parent=1 // pred_region
      _
    $region25: #{tpu_custom_call.1} parent=1 // pred_fallthru
      _
    // Predicated region
    $region26: #{tpu_custom_call.1} parent=1 // pred_check
      _
    $region27: #{tpu_custom_call.1} parent=1 // pred_check_branch
      %30 = sbr.rel (0) target = $region29
    $region28: #{tpu_custom_call.1} parent=1 // pred_region
      _
    $region29: #{tpu_custom_call.1} parent=1 // pred_fallthru
      _
    // Predicated region
    $region30: #{tpu_custom_call.1} parent=1 // pred_check
      _
    $region31: #{tpu_custom_call.1} parent=1 // pred_check_branch
      %32 = sbr.rel (0) target = $region33
    $region32: #{tpu_custom_call.1} parent=1 // pred_region
      _
    $region33: #{tpu_custom_call.1} parent=1 // pred_fallthru
      _
    %v33 = vld [vmem:[%s0] sm:$0xff]
    %v34 = vld [vmem:[%s0 + $0x8] sm:$0xff]
    %v35 = vld [vmem:[%s2] sm:$0xff]
    %v36 = vld [vmem:[%s2 + $0x8] sm:$0xff]
    %v37 = vld [vmem:[%s2 + $0x10] sm:$0xff]
    %v38 = vld [vmem:[%s2 + $0x18] sm:$0xff]
    %v39 = vld [vmem:[%s3] sm:$0x1]
    %v41 = vlaneseq
    %v42 = vshrl.u32 %v41, 7
    %v43 = vsub.s32 0, %v42
    %v44 = vrot.slane %v39, %v43
    %vm46 = vcmask 261120
    %v48 = vsel %vm46, %v33, 0
    %v51 = vsel %vm46, %v34, 0
    %53 = vmatprep.subr.mxu0 0.0
    %54 = vmatpush1.msra.mxu0 %v35
    %55 = vmatprep.subr.mxu0 0.0
    %56 = vmatpush1.msra.mxu0 %v36
    %57 = vmatprep.subr.mxu0 0.0
    %58 = vmatpush1.msra.mxu0 %v37
    %59 = vmatprep.subr.mxu0 0.0
    %60 = vmatpush1.msra.mxu0 %v38
    %61 = vmatprep.subr.mxu0 0.0
    %62 = vmatpush1.msra.mxu0 0.0
    %63 = vmatprep.subr.mxu0 0.0
    %64 = vmatpush1.msra.mxu0 0.0
    %65 = vmatprep.subr.mxu0 0.0
    %66 = vmatpush1.msra.mxu0 0.0
    %67 = vmatprep.subr.mxu0 0.0
    %68 = vmatpush1.msra.mxu0 0.0
    %69 = vmatprep.subr.mxu0 0.0
    %70 = vmatpush1.msra.mxu0 0.0
    %71 = vmatprep.subr.mxu0 0.0
    %72 = vmatpush1.msra.mxu0 0.0
    %73 = vmatprep.subr.mxu0 0.0
    %74 = vmatpush1.msra.mxu0 0.0
    %75 = vmatprep.subr.mxu0 0.0
    %76 = vmatpush1.msra.mxu0 0.0
    %77 = vmatprep.subr.mxu0 0.0
    %78 = vmatpush1.msra.mxu0 0.0
    %79 = vmatprep.subr.mxu0 0.0
    %80 = vmatpush1.msra.mxu0 0.0
    %81 = vmatprep.subr.mxu0 0.0
    %82 = vmatpush1.msra.mxu0 0.0
    %83 = vmatprep.subr.mxu0 0.0
    %84 = vmatpush1.msra.mxu0 0.0
    %85 = vmatprep.subr.mxu0 0.0
    %86 = vmatpush1.msra.mxu0 0.0
    %87 = vmatprep.subr.mxu0 0.0
    %88 = vmatpush1.msra.mxu0 0.0
    %89 = vmatprep.subr.mxu0 0.0
    %90 = vmatpush1.msra.mxu0 0.0
    %91 = vmatprep.subr.mxu0 0.0
    %92 = vmatpush1.msra.mxu0 0.0
    %93 = vmatprep.subr.mxu0 0.0
    %94 = vmatpush1.msra.mxu0 0.0
    %95 = vmatprep.subr.mxu0 0.0
    %96 = vmatpush1.msra.mxu0 0.0
    %97 = vmatprep.subr.mxu0 0.0
    %98 = vmatpush1.msra.mxu0 0.0
    %99 = vmatprep.subr.mxu0 0.0
    %100 = vmatpush1.msra.mxu0 0.0
    %101 = vmatprep.subr.mxu0 0.0
    %102 = vmatpush1.msra.mxu0 0.0
    %103 = vmatprep.subr.mxu0 0.0
    %104 = vmatpush1.msra.mxu0 0.0
    %105 = vmatprep.subr.mxu0 0.0
    %106 = vmatpush1.msra.mxu0 0.0
    %107 = vmatprep.subr.mxu0 0.0
    %108 = vmatpush1.msra.mxu0 0.0
    %109 = vmatprep.subr.mxu0 0.0
    %110 = vmatpush1.msra.mxu0 0.0
    %111 = vmatprep.subr.mxu0 0.0
    %112 = vmatpush1.msra.mxu0 0.0
    %113 = vmatprep.subr.mxu0 0.0
    %114 = vmatpush1.msra.mxu0 0.0
    %115 = vmatprep.subr.mxu0 0.0
    %116 = vmatpush1.msra.mxu0 0.0
    %117 = vmatprep.mubr.f32.mxu0 0.0
    %118 = vmatmul.mubr.f32.gmra.mrb[0].mxu0 %v48
    %v119 = vpop.f32.mrb[0].mxu0
    %v120 = vadd.f32 %v44, %v119
    %v121 = vpop.f32.mrb[0].mxu0
    %122 = vmatprep.mubr.f32.mxu0 0.0
    %123 = vmatmul.mubr.f32.gmra.mrb[0].mxu0 %v51
    %v124 = vpop.f32.mrb[0].mxu0
    %v125 = vadd.f32 %v44, %v124
    %v126 = vpop.f32.mrb[0].mxu0
    %127 = vdwg.mxu0
    %v128 = vxor.u32 %v120, 2147483648
    %v129 = vxor.u32 %v125, 2147483648
    %v130 = vmul.f32 %v128, 1.442695
    %v131 = vpow.pop %v130
    %v132 = vmul.f32 %v129, 1.442695
    %v133 = vpow.pop %v132
    %v134 = vadd.f32 %v131, 1.0
    %v135 = vadd.f32 %v133, 1.0
    %v136 = vrcp.pop %v134
    %v137 = vmul.f32 1.0, %v136
    %v138 = vrcp.pop %v135
    %v139 = vmul.f32 1.0, %v138
    %v140 = vld [vmem:[%s4] sm:$0xff]
    %v141 = vld [vmem:[%s4 + $0x8] sm:$0xff]
    %v142 = vld [vmem:[%s4 + $0x10] sm:$0xff]
    %v143 = vld [vmem:[%s4 + $0x18] sm:$0xff]
    %v144 = vld [vmem:[%s4 + $0x20] sm:$0xff]
    %v145 = vld [vmem:[%s4 + $0x28] sm:$0xff]
    %v146 = vld [vmem:[%s4 + $0x30] sm:$0xff]
    %v147 = vld [vmem:[%s4 + $0x38] sm:$0xff]
    %v148 = vld [vmem:[%s5] sm:$0x1]
    %v150 = vlaneseq
    %v151 = vshrl.u32 %v150, 7
    %v152 = vsub.s32 0, %v151
    %v153 = vrot.slane %v148, %v152
    %vm155 = vcmask 523264
    %v157 = vsel %vm155, %v137, 0
    %v160 = vsel %vm155, %v139, 0
    %162 = vmatprep.subr.mxu0 0.0
    %163 = vmatpush1.msra.mxu0 %v140
    %164 = vmatprep.subr.mxu0 0.0
    %165 = vmatpush1.msra.mxu0 %v141
    %166 = vmatprep.subr.mxu0 0.0
    %167 = vmatpush1.msra.mxu0 %v142
    %168 = vmatprep.subr.mxu0 0.0
    %169 = vmatpush1.msra.mxu0 %v143
    %170 = vmatprep.subr.mxu0 0.0
    %171 = vmatpush1.msra.mxu0 %v144
    %172 = vmatprep.subr.mxu0 0.0
    %173 = vmatpush1.msra.mxu0 %v145
    %174 = vmatprep.subr.mxu0 0.0
    %175 = vmatpush1.msra.mxu0 %v146
    %176 = vmatprep.subr.mxu0 0.0
    %177 = vmatpush1.msra.mxu0 %v147
    %178 = vmatprep.subr.mxu0 0.0
    %179 = vmatpush1.msra.mxu0 0.0
    %180 = vmatprep.subr.mxu0 0.0
    %181 = vmatpush1.msra.mxu0 0.0
    %182 = vmatprep.subr.mxu0 0.0
    %183 = vmatpush1.msra.mxu0 0.0
    %184 = vmatprep.subr.mxu0 0.0
    %185 = vmatpush1.msra.mxu0 0.0
    %186 = vmatprep.subr.mxu0 0.0
    %187 = vmatpush1.msra.mxu0 0.0
    %188 = vmatprep.subr.mxu0 0.0
    %189 = vmatpush1.msra.mxu0 0.0
    %190 = vmatprep.subr.mxu0 0.0
    %191 = vmatpush1.msra.mxu0 0.0
    %192 = vmatprep.subr.mxu0 0.0
    %193 = vmatpush1.msra.mxu0 0.0
    %194 = vmatprep.subr.mxu0 0.0
    %195 = vmatpush1.msra.mxu0 0.0
    %196 = vmatprep.subr.mxu0 0.0
    %197 = vmatpush1.msra.mxu0 0.0
    %198 = vmatprep.subr.mxu0 0.0
    %199 = vmatpush1.msra.mxu0 0.0
    %200 = vmatprep.subr.mxu0 0.0
    %201 = vmatpush1.msra.mxu0 0.0
    %202 = vmatprep.subr.mxu0 0.0
    %203 = vmatpush1.msra.mxu0 0.0
    %204 = vmatprep.subr.mxu0 0.0
    %205 = vmatpush1.msra.mxu0 0.0
    %206 = vmatprep.subr.mxu0 0.0
    %207 = vmatpush1.msra.mxu0 0.0
    %208 = vmatprep.subr.mxu0 0.0
    %209 = vmatpush1.msra.mxu0 0.0
    %210 = vmatprep.subr.mxu0 0.0
    %211 = vmatpush1.msra.mxu0 0.0
    %212 = vmatprep.subr.mxu0 0.0
    %213 = vmatpush1.msra.mxu0 0.0
    %214 = vmatprep.subr.mxu0 0.0
    %215 = vmatpush1.msra.mxu0 0.0
    %216 = vmatprep.subr.mxu0 0.0
    %217 = vmatpush1.msra.mxu0 0.0
    %218 = vmatprep.subr.mxu0 0.0
    %219 = vmatpush1.msra.mxu0 0.0
    %220 = vmatprep.subr.mxu0 0.0
    %221 = vmatpush1.msra.mxu0 0.0
    %222 = vmatprep.subr.mxu0 0.0
    %223 = vmatpush1.msra.mxu0 0.0
    %224 = vmatprep.subr.mxu0 0.0
    %225 = vmatpush1.msra.mxu0 0.0
    %226 = vmatprep.mubr.f32.mxu0 0.0
    %227 = vmatmul.mubr.f32.gmra.mrb[0].mxu0 %v157
    %v228 = vpop.f32.mrb[0].mxu0
    %v229 = vadd.f32 %v153, %v228
    %v230 = vpop.f32.mrb[0].mxu0
    %231 = vmatprep.mubr.f32.mxu0 0.0
    %232 = vmatmul.mubr.f32.gmra.mrb[0].mxu0 %v160
    %v233 = vpop.f32.mrb[0].mxu0
    %v234 = vadd.f32 %v153, %v233
    %v235 = vpop.f32.mrb[0].mxu0
    %236 = vdwg.mxu0
    %v237 = vxor.u32 %v229, 2147483648
    %v238 = vxor.u32 %v234, 2147483648
    %v239 = vmul.f32 %v237, 1.442695
    %v240 = vpow.pop %v239
    %v241 = vmul.f32 %v238, 1.442695
    %v242 = vpow.pop %v241
    %v243 = vadd.f32 %v240, 1.0
    %v244 = vadd.f32 %v242, 1.0
    %v245 = vrcp.pop %v243
    %v246 = vmul.f32 1.0, %v245
    %v247 = vrcp.pop %v244
    %v248 = vmul.f32 1.0, %v247
    %v249 = vld [vmem:[%s6] sm:$0xff]
    %v250 = vld [vmem:[%s6 + $0x8] sm:$0xff]
    %v251 = vld [vmem:[%s6 + $0x10] sm:$0xff]
    %v252 = vld [vmem:[%s6 + $0x18] sm:$0xff]
    %v253 = vld [vmem:[%s6 + $0x20] sm:$0xff]
    %v254 = vld [vmem:[%s6 + $0x28] sm:$0xff]
    %v255 = vld [vmem:[%s7] sm:$0x1]
    %v257 = vlaneseq
    %v258 = vshrl.u32 %v257, 7
    %v259 = vsub.s32 0, %v258
    %v260 = vrot.slane %v255, %v259
    %vm262 = vcmask 392192
    %v264 = vsel %vm262, %v246, 0
    %v267 = vsel %vm262, %v248, 0
    %269 = vmatprep.subr.mxu0 0.0
    %270 = vmatpush1.msra.mxu0 %v249
    %271 = vmatprep.subr.mxu0 0.0
    %272 = vmatpush1.msra.mxu0 %v250
    %273 = vmatprep.subr.mxu0 0.0
    %274 = vmatpush1.msra.mxu0 %v251
    %275 = vmatprep.subr.mxu0 0.0
    %276 = vmatpush1.msra.mxu0 %v252
    %277 = vmatprep.subr.mxu0 0.0
    %278 = vmatpush1.msra.mxu0 %v253
    %279 = vmatprep.subr.mxu0 0.0
    %280 = vmatpush1.msra.mxu0 %v254
    %281 = vmatprep.subr.mxu0 0.0
    %282 = vmatpush1.msra.mxu0 0.0
    %283 = vmatprep.subr.mxu0 0.0
    %284 = vmatpush1.msra.mxu0 0.0
    %285 = vmatprep.subr.mxu0 0.0
    %286 = vmatpush1.msra.mxu0 0.0
    %287 = vmatprep.subr.mxu0 0.0
    %288 = vmatpush1.msra.mxu0 0.0
    %289 = vmatprep.subr.mxu0 0.0
    %290 = vmatpush1.msra.mxu0 0.0
    %291 = vmatprep.subr.mxu0 0.0
    %292 = vmatpush1.msra.mxu0 0.0
    %293 = vmatprep.subr.mxu0 0.0
    %294 = vmatpush1.msra.mxu0 0.0
    %295 = vmatprep.subr.mxu0 0.0
    %296 = vmatpush1.msra.mxu0 0.0
    %297 = vmatprep.subr.mxu0 0.0
    %298 = vmatpush1.msra.mxu0 0.0
    %299 = vmatprep.subr.mxu0 0.0
    %300 = vmatpush1.msra.mxu0 0.0
    %301 = vmatprep.subr.mxu0 0.0
    %302 = vmatpush1.msra.mxu0 0.0
    %303 = vmatprep.subr.mxu0 0.0
    %304 = vmatpush1.msra.mxu0 0.0
    %305 = vmatprep.subr.mxu0 0.0
    %306 = vmatpush1.msra.mxu0 0.0
    %307 = vmatprep.subr.mxu0 0.0
    %308 = vmatpush1.msra.mxu0 0.0
    %309 = vmatprep.subr.mxu0 0.0
    %310 = vmatpush1.msra.mxu0 0.0
    %311 = vmatprep.subr.mxu0 0.0
    %312 = vmatpush1.msra.mxu0 0.0
    %313 = vmatprep.subr.mxu0 0.0
    %314 = vmatpush1.msra.mxu0 0.0
    %315 = vmatprep.subr.mxu0 0.0
    %316 = vmatpush1.msra.mxu0 0.0
    %317 = vmatprep.subr.mxu0 0.0
    %318 = vmatpush1.msra.mxu0 0.0
    %319 = vmatprep.subr.mxu0 0.0
    %320 = vmatpush1.msra.mxu0 0.0
    %321 = vmatprep.subr.mxu0 0.0
    %322 = vmatpush1.msra.mxu0 0.0
    %323 = vmatprep.subr.mxu0 0.0
    %324 = vmatpush1.msra.mxu0 0.0
    %325 = vmatprep.subr.mxu0 0.0
    %326 = vmatpush1.msra.mxu0 0.0
    %327 = vmatprep.subr.mxu0 0.0
    %328 = vmatpush1.msra.mxu0 0.0
    %329 = vmatprep.subr.mxu0 0.0
    %330 = vmatpush1.msra.mxu0 0.0
    %331 = vmatprep.subr.mxu0 0.0
    %332 = vmatpush1.msra.mxu0 0.0
    %333 = vmatprep.mubr.f32.mxu0 0.0
    %334 = vmatmul.mubr.f32.gmra.mrb[0].mxu0 %v264
    %v335 = vpop.f32.mrb[0].mxu0
    %v336 = vadd.f32 %v260, %v335
    %v337 = vpop.f32.mrb[0].mxu0
    %338 = vmatprep.mubr.f32.mxu0 0.0
    %339 = vmatmul.mubr.f32.gmra.mrb[0].mxu0 %v267
    %v340 = vpop.f32.mrb[0].mxu0
    %v341 = vadd.f32 %v260, %v340
    %v342 = vpop.f32.mrb[0].mxu0
    %343 = vdwg.mxu0
    %v344 = vxor.u32 %v336, 2147483648
    %v345 = vxor.u32 %v341, 2147483648
    %v346 = vmul.f32 %v344, 1.442695
    %v347 = vpow.pop %v346
    %v348 = vmul.f32 %v345, 1.442695
    %v349 = vpow.pop %v348
    %v350 = vadd.f32 %v347, 1.0
    %v351 = vadd.f32 %v349, 1.0
    %v352 = vrcp.pop %v350
    %v353 = vmul.f32 1.0, %v352
    %v354 = vrcp.pop %v351
    %v355 = vmul.f32 1.0, %v354
    %vm356 = vcmask 130048
    %357 = vst.msk [vmem:[#allocation2] sm:$0xff] %vm356, %v353
    %358 = vst.msk [vmem:[#allocation2 + $0x8] sm:$0xff] %vm356, %v355
    %v359 = vld [vmem:[%s1] sm:$0xff]
    %v360 = vld [vmem:[%s1 + $0x8] sm:$0xff]
    %v361 = vld [vmem:[%s2] sm:$0xff]
    %v362 = vld [vmem:[%s2 + $0x8] sm:$0xff]
    %v363 = vld [vmem:[%s2 + $0x10] sm:$0xff]
    %v364 = vld [vmem:[%s2 + $0x18] sm:$0xff]
    %v365 = vld [vmem:[%s3] sm:$0x1]
    %v367 = vlaneseq
    %v368 = vshrl.u32 %v367, 7
    %v369 = vsub.s32 0, %v368
    %v370 = vrot.slane %v365, %v369
    %v373 = vsel %vm46, %v359, 0
    %v376 = vsel %vm46, %v360, 0
    %378 = vmatprep.subr.mxu0 0.0
    %379 = vmatpush1.msra.mxu0 %v361
    %380 = vmatprep.subr.mxu0 0.0
    %381 = vmatpush1.msra.mxu0 %v362
    %382 = vmatprep.subr.mxu0 0.0
    %383 = vmatpush1.msra.mxu0 %v363
    %384 = vmatprep.subr.mxu0 0.0
    %385 = vmatpush1.msra.mxu0 %v364
    %386 = vmatprep.subr.mxu0 0.0
    %387 = vmatpush1.msra.mxu0 0.0
    %388 = vmatprep.subr.mxu0 0.0
    %389 = vmatpush1.msra.mxu0 0.0
    %390 = vmatprep.subr.mxu0 0.0
    %391 = vmatpush1.msra.mxu0 0.0
    %392 = vmatprep.subr.mxu0 0.0
    %393 = vmatpush1.msra.mxu0 0.0
    %394 = vmatprep.subr.mxu0 0.0
    %395 = vmatpush1.msra.mxu0 0.0
    %396 = vmatprep.subr.mxu0 0.0
    %397 = vmatpush1.msra.mxu0 0.0
    %398 = vmatprep.subr.mxu0 0.0
    %399 = vmatpush1.msra.mxu0 0.0
    %400 = vmatprep.subr.mxu0 0.0
    %401 = vmatpush1.msra.mxu0 0.0
    %402 = vmatprep.subr.mxu0 0.0
    %403 = vmatpush1.msra.mxu0 0.0
    %404 = vmatprep.subr.mxu0 0.0
    %405 = vmatpush1.msra.mxu0 0.0
    %406 = vmatprep.subr.mxu0 0.0
    %407 = vmatpush1.msra.mxu0 0.0
    %408 = vmatprep.subr.mxu0 0.0
    %409 = vmatpush1.msra.mxu0 0.0
    %410 = vmatprep.subr.mxu0 0.0
    %411 = vmatpush1.msra.mxu0 0.0
    %412 = vmatprep.subr.mxu0 0.0
    %413 = vmatpush1.msra.mxu0 0.0
    %414 = vmatprep.subr.mxu0 0.0
    %415 = vmatpush1.msra.mxu0 0.0
    %416 = vmatprep.subr.mxu0 0.0
    %417 = vmatpush1.msra.mxu0 0.0
    %418 = vmatprep.subr.mxu0 0.0
    %419 = vmatpush1.msra.mxu0 0.0
    %420 = vmatprep.subr.mxu0 0.0
    %421 = vmatpush1.msra.mxu0 0.0
    %422 = vmatprep.subr.mxu0 0.0
    %423 = vmatpush1.msra.mxu0 0.0
    %424 = vmatprep.subr.mxu0 0.0
    %425 = vmatpush1.msra.mxu0 0.0
    %426 = vmatprep.subr.mxu0 0.0
    %427 = vmatpush1.msra.mxu0 0.0
    %428 = vmatprep.subr.mxu0 0.0
    %429 = vmatpush1.msra.mxu0 0.0
    %430 = vmatprep.subr.mxu0 0.0
    %431 = vmatpush1.msra.mxu0 0.0
    %432 = vmatprep.subr.mxu0 0.0
    %433 = vmatpush1.msra.mxu0 0.0
    %434 = vmatprep.subr.mxu0 0.0
    %435 = vmatpush1.msra.mxu0 0.0
    %436 = vmatprep.subr.mxu0 0.0
    %437 = vmatpush1.msra.mxu0 0.0
    %438 = vmatprep.subr.mxu0 0.0
    %439 = vmatpush1.msra.mxu0 0.0
    %440 = vmatprep.subr.mxu0 0.0
    %441 = vmatpush1.msra.mxu0 0.0
    %442 = vmatprep.mubr.f32.mxu0 0.0
    %443 = vmatmul.mubr.f32.gmra.mrb[0].mxu0 %v373
    %v444 = vpop.f32.mrb[0].mxu0
    %v445 = vadd.f32 %v370, %v444
    %v446 = vpop.f32.mrb[0].mxu0
    %447 = vmatprep.mubr.f32.mxu0 0.0
    %448 = vmatmul.mubr.f32.gmra.mrb[0].mxu0 %v376
    %v449 = vpop.f32.mrb[0].mxu0
    %v450 = vadd.f32 %v370, %v449
    %v451 = vpop.f32.mrb[0].mxu0
    %452 = vdwg.mxu0
    %v453 = vxor.u32 %v445, 2147483648
    %v454 = vxor.u32 %v450, 2147483648
    %v455 = vmul.f32 %v453, 1.442695
    %v456 = vpow.pop %v455
    %v457 = vmul.f32 %v454, 1.442695
    %v458 = vpow.pop %v457
    %v459 = vadd.f32 %v456, 1.0
    %v460 = vadd.f32 %v458, 1.0
    %v461 = vrcp.pop %v459
    %v462 = vmul.f32 1.0, %v461
    %v463 = vrcp.pop %v460
    %v464 = vmul.f32 1.0, %v463
    %v465 = vld [vmem:[%s4] sm:$0xff]
    %v466 = vld [vmem:[%s4 + $0x8] sm:$0xff]
    %v467 = vld [vmem:[%s4 + $0x10] sm:$0xff]
    %v468 = vld [vmem:[%s4 + $0x18] sm:$0xff]
    %v469 = vld [vmem:[%s4 + $0x20] sm:$0xff]
    %v470 = vld [vmem:[%s4 + $0x28] sm:$0xff]
    %v471 = vld [vmem:[%s4 + $0x30] sm:$0xff]
    %v472 = vld [vmem:[%s4 + $0x38] sm:$0xff]
    %v473 = vld [vmem:[%s5] sm:$0x1]
    %v475 = vlaneseq
    %v476 = vshrl.u32 %v475, 7
    %v477 = vsub.s32 0, %v476
    %v478 = vrot.slane %v473, %v477
    %v481 = vsel %vm155, %v462, 0
    %v484 = vsel %vm155, %v464, 0
    %486 = vmatprep.subr.mxu0 0.0
    %487 = vmatpush1.msra.mxu0 %v465
    %488 = vmatprep.subr.mxu0 0.0
    %489 = vmatpush1.msra.mxu0 %v466
    %490 = vmatprep.subr.mxu0 0.0
    %491 = vmatpush1.msra.mxu0 %v467
    %492 = vmatprep.subr.mxu0 0.0
    %493 = vmatpush1.msra.mxu0 %v468
    %494 = vmatprep.subr.mxu0 0.0
    %495 = vmatpush1.msra.mxu0 %v469
    %496 = vmatprep.subr.mxu0 0.0
    %497 = vmatpush1.msra.mxu0 %v470
    %498 = vmatprep.subr.mxu0 0.0
    %499 = vmatpush1.msra.mxu0 %v471
    %500 = vmatprep.subr.mxu0 0.0
    %501 = vmatpush1.msra.mxu0 %v472
    %502 = vmatprep.subr.mxu0 0.0
    %503 = vmatpush1.msra.mxu0 0.0
    %504 = vmatprep.subr.mxu0 0.0
    %505 = vmatpush1.msra.mxu0 0.0
    %506 = vmatprep.subr.mxu0 0.0
    %507 = vmatpush1.msra.mxu0 0.0
    %508 = vmatprep.subr.mxu0 0.0
    %509 = vmatpush1.msra.mxu0 0.0
    %510 = vmatprep.subr.mxu0 0.0
    %511 = vmatpush1.msra.mxu0 0.0
    %512 = vmatprep.subr.mxu0 0.0
    %513 = vmatpush1.msra.mxu0 0.0
    %514 = vmatprep.subr.mxu0 0.0
    %515 = vmatpush1.msra.mxu0 0.0
    %516 = vmatprep.subr.mxu0 0.0
    %517 = vmatpush1.msra.mxu0 0.0
    %518 = vmatprep.subr.mxu0 0.0
    %519 = vmatpush1.msra.mxu0 0.0
    %520 = vmatprep.subr.mxu0 0.0
    %521 = vmatpush1.msra.mxu0 0.0
    %522 = vmatprep.subr.mxu0 0.0
    %523 = vmatpush1.msra.mxu0 0.0
    %524 = vmatprep.subr.mxu0 0.0
    %525 = vmatpush1.msra.mxu0 0.0
    %526 = vmatprep.subr.mxu0 0.0
    %527 = vmatpush1.msra.mxu0 0.0
    %528 = vmatprep.subr.mxu0 0.0
    %529 = vmatpush1.msra.mxu0 0.0
    %530 = vmatprep.subr.mxu0 0.0
    %531 = vmatpush1.msra.mxu0 0.0
    %532 = vmatprep.subr.mxu0 0.0
    %533 = vmatpush1.msra.mxu0 0.0
    %534 = vmatprep.subr.mxu0 0.0
    %535 = vmatpush1.msra.mxu0 0.0
    %536 = vmatprep.subr.mxu0 0.0
    %537 = vmatpush1.msra.mxu0 0.0
    %538 = vmatprep.subr.mxu0 0.0
    %539 = vmatpush1.msra.mxu0 0.0
    %540 = vmatprep.subr.mxu0 0.0
    %541 = vmatpush1.msra.mxu0 0.0
    %542 = vmatprep.subr.mxu0 0.0
    %543 = vmatpush1.msra.mxu0 0.0
    %544 = vmatprep.subr.mxu0 0.0
    %545 = vmatpush1.msra.mxu0 0.0
    %546 = vmatprep.subr.mxu0 0.0
    %547 = vmatpush1.msra.mxu0 0.0
    %548 = vmatprep.subr.mxu0 0.0
    %549 = vmatpush1.msra.mxu0 0.0
    %550 = vmatprep.mubr.f32.mxu0 0.0
    %551 = vmatmul.mubr.f32.gmra.mrb[0].mxu0 %v481
    %v552 = vpop.f32.mrb[0].mxu0
    %v553 = vadd.f32 %v478, %v552
    %v554 = vpop.f32.mrb[0].mxu0
    %555 = vmatprep.mubr.f32.mxu0 0.0
    %556 = vmatmul.mubr.f32.gmra.mrb[0].mxu0 %v484
    %v557 = vpop.f32.mrb[0].mxu0
    %v558 = vadd.f32 %v478, %v557
    %v559 = vpop.f32.mrb[0].mxu0
    %560 = vdwg.mxu0
    %v561 = vxor.u32 %v553, 2147483648
    %v562 = vxor.u32 %v558, 2147483648
    %v563 = vmul.f32 %v561, 1.442695
    %v564 = vpow.pop %v563
    %v565 = vmul.f32 %v562, 1.442695
    %v566 = vpow.pop %v565
    %v567 = vadd.f32 %v564, 1.0
    %v568 = vadd.f32 %v566, 1.0
    %v569 = vrcp.pop %v567
    %v570 = vmul.f32 1.0, %v569
    %v571 = vrcp.pop %v568
    %v572 = vmul.f32 1.0, %v571
    %v573 = vld [vmem:[%s6] sm:$0xff]
    %v574 = vld [vmem:[%s6 + $0x8] sm:$0xff]
    %v575 = vld [vmem:[%s6 + $0x10] sm:$0xff]
    %v576 = vld [vmem:[%s6 + $0x18] sm:$0xff]
    %v577 = vld [vmem:[%s6 + $0x20] sm:$0xff]
    %v578 = vld [vmem:[%s6 + $0x28] sm:$0xff]
    %v579 = vld [vmem:[%s7] sm:$0x1]
    %v581 = vlaneseq
    %v582 = vshrl.u32 %v581, 7
    %v583 = vsub.s32 0, %v582
    %v584 = vrot.slane %v579, %v583
    %v587 = vsel %vm262, %v570, 0
    %v590 = vsel %vm262, %v572, 0
    %592 = vmatprep.subr.mxu0 0.0
    %593 = vmatpush1.msra.mxu0 %v573
    %594 = vmatprep.subr.mxu0 0.0
    %595 = vmatpush1.msra.mxu0 %v574
    %596 = vmatprep.subr.mxu0 0.0
    %597 = vmatpush1.msra.mxu0 %v575
    %598 = vmatprep.subr.mxu0 0.0
    %599 = vmatpush1.msra.mxu0 %v576
    %600 = vmatprep.subr.mxu0 0.0
    %601 = vmatpush1.msra.mxu0 %v577
    %602 = vmatprep.subr.mxu0 0.0
    %603 = vmatpush1.msra.mxu0 %v578
    %604 = vmatprep.subr.mxu0 0.0
    %605 = vmatpush1.msra.mxu0 0.0
    %606 = vmatprep.subr.mxu0 0.0
    %607 = vmatpush1.msra.mxu0 0.0
    %608 = vmatprep.subr.mxu0 0.0
    %609 = vmatpush1.msra.mxu0 0.0
    %610 = vmatprep.subr.mxu0 0.0
    %611 = vmatpush1.msra.mxu0 0.0
    %612 = vmatprep.subr.mxu0 0.0
    %613 = vmatpush1.msra.mxu0 0.0
    %614 = vmatprep.subr.mxu0 0.0
    %615 = vmatpush1.msra.mxu0 0.0
    %616 = vmatprep.subr.mxu0 0.0
    %617 = vmatpush1.msra.mxu0 0.0
    %618 = vmatprep.subr.mxu0 0.0
    %619 = vmatpush1.msra.mxu0 0.0
    %620 = vmatprep.subr.mxu0 0.0
    %621 = vmatpush1.msra.mxu0 0.0
    %622 = vmatprep.subr.mxu0 0.0
    %623 = vmatpush1.msra.mxu0 0.0
    %624 = vmatprep.subr.mxu0 0.0
    %625 = vmatpush1.msra.mxu0 0.0
    %626 = vmatprep.subr.mxu0 0.0
    %627 = vmatpush1.msra.mxu0 0.0
    %628 = vmatprep.subr.mxu0 0.0
    %629 = vmatpush1.msra.mxu0 0.0
    %630 = vmatprep.subr.mxu0 0.0
    %631 = vmatpush1.msra.mxu0 0.0
    %632 = vmatprep.subr.mxu0 0.0
    %633 = vmatpush1.msra.mxu0 0.0
    %634 = vmatprep.subr.mxu0 0.0
    %635 = vmatpush1.msra.mxu0 0.0
    %636 = vmatprep.subr.mxu0 0.0
    %637 = vmatpush1.msra.mxu0 0.0
    %638 = vmatprep.subr.mxu0 0.0
    %639 = vmatpush1.msra.mxu0 0.0
    %640 = vmatprep.subr.mxu0 0.0
    %641 = vmatpush1.msra.mxu0 0.0
    %642 = vmatprep.subr.mxu0 0.0
    %643 = vmatpush1.msra.mxu0 0.0
    %644 = vmatprep.subr.mxu0 0.0
    %645 = vmatpush1.msra.mxu0 0.0
    %646 = vmatprep.subr.mxu0 0.0
    %647 = vmatpush1.msra.mxu0 0.0
    %648 = vmatprep.subr.mxu0 0.0
    %649 = vmatpush1.msra.mxu0 0.0
    %650 = vmatprep.subr.mxu0 0.0
    %651 = vmatpush1.msra.mxu0 0.0
    %652 = vmatprep.subr.mxu0 0.0
    %653 = vmatpush1.msra.mxu0 0.0
    %654 = vmatprep.subr.mxu0 0.0
    %655 = vmatpush1.msra.mxu0 0.0
    %656 = vmatprep.mubr.f32.mxu0 0.0
    %657 = vmatmul.mubr.f32.gmra.mrb[0].mxu0 %v587
    %v658 = vpop.f32.mrb[0].mxu0
    %v659 = vadd.f32 %v584, %v658
    %v660 = vpop.f32.mrb[0].mxu0
    %661 = vmatprep.mubr.f32.mxu0 0.0
    %662 = vmatmul.mubr.f32.gmra.mrb[0].mxu0 %v590
    %v663 = vpop.f32.mrb[0].mxu0
    %v664 = vadd.f32 %v584, %v663
    %v665 = vpop.f32.mrb[0].mxu0
    %666 = vdwg.mxu0
    %v667 = vxor.u32 %v659, 2147483648
    %v668 = vxor.u32 %v664, 2147483648
    %v669 = vmul.f32 %v667, 1.442695
    %v670 = vpow.pop %v669
    %v671 = vmul.f32 %v668, 1.442695
    %v672 = vpow.pop %v671
    %v673 = vadd.f32 %v670, 1.0
    %v674 = vadd.f32 %v672, 1.0
    %v675 = vrcp.pop %v673
    %v676 = vmul.f32 1.0, %v675
    %v677 = vrcp.pop %v674
    %v678 = vmul.f32 1.0, %v677
    %679 = vst.msk [vmem:[#allocation4] sm:$0xff] %vm356, %v676
    %680 = vst.msk [vmem:[#allocation4 + $0x8] sm:$0xff] %vm356, %v678
    // Predicated region
    $region34: #{tpu_custom_call.1} parent=1 // pred_check
      _
    $region35: #{tpu_custom_call.1} parent=1 // pred_check_branch
      %682 = sbr.rel (0) target = $region37
    $region36: #{tpu_custom_call.1} parent=1 // pred_region
      %s684 = ssub.s32 256, 256
      %685 = vsyncadd [#allocation3], %s684
      %s686 = sshll.u32 [#allocation2], 4
      %s687 = int_to_ptr.vmem [resolvable:$true] %s686
      %692 = dma.vmem_to_hbm [thread:$0]  %s687, 256, %s8, [#allocation3], 128, 128, 8
    $region37: #{tpu_custom_call.1} parent=1 // pred_fallthru
      _
    // Predicated region
    $region38: #{tpu_custom_call.1} parent=1 // pred_check
      _
    $region39: #{tpu_custom_call.1} parent=1 // pred_check_branch
      %694 = sbr.rel (0) target = $region41
    $region40: #{tpu_custom_call.1} parent=1 // pred_region
      %s696 = ssub.s32 256, 256
      %697 = vsyncadd [#allocation5], %s696
      %s698 = sshll.u32 [#allocation4], 4
      %s699 = int_to_ptr.vmem [resolvable:$true] %s698
      %704 = dma.vmem_to_hbm [thread:$0]  %s699, 256, %s9, [#allocation5], 128, 128, 8
    $region41: #{tpu_custom_call.1} parent=1 // pred_fallthru
      _
    // Predicated region
    $region42: #{tpu_custom_call.1} parent=1 // pred_check
      _
    $region43: #{tpu_custom_call.1} parent=1 // pred_check_branch
      %706 = sbr.rel (0) target = $region45
    $region44: #{tpu_custom_call.1} parent=1 // pred_region
      %707 = dma.done [#allocation3], 256
    $region45: #{tpu_custom_call.1} parent=1 // pred_fallthru
      _
    // Predicated region
    $region46: #{tpu_custom_call.1} parent=1 // pred_check
      _
    $region47: #{tpu_custom_call.1} parent=1 // pred_check_branch
      %709 = sbr.rel (0) target = $region49
    $region48: #{tpu_custom_call.1} parent=1 // pred_region
      %710 = dma.done [#allocation5], 256
    $region49: #{tpu_custom_call.1} parent=1 // pred_fallthru
      _
    %711 = vsyncpa [#allocation3], 1
    %712 = vsyncpa [#allocation5], 1

</llo_original>
